<compile_context>
chip_gen: v6e
topology: v6e:2x2x1
jax: 0.10.0
libtpu: 0.0.40
codegen_flags: <defaults>
</compile_context>

<pallas_src>
import functools

import jax
import jax.numpy as jnp
from jax.experimental import pallas as pl
from jax.experimental.pallas import tpu as pltpu

_TILE_BUDGET_BYTES = 8 * 1024 * 1024    # physical-VMEM working-set budget per call
_VMEM_LIMIT_BYTES = 32 * 1024 * 1024    # safe on v5e / v6e / v7x (<= scoped default)


def _round_up(x, m):
    return ((x + m - 1) // m) * m


def _cdiv(a, b):
    return -(-a // b)


def _pick_lane_tile(total, per_col_bytes, cap=None):
    """Largest lane tile (multiple of 128) whose physical working set fits the budget."""
    tile = (_TILE_BUDGET_BYTES // max(per_col_bytes, 1)) // 128 * 128
    tile = max(tile, 128)
    if cap is not None:
        tile = min(tile, max(128, (cap // 128) * 128))
    if total < 128:
        return total                      # block dim == full array dim is allowed
    return min(tile, (total // 128) * 128)


# ----------------------------------------------------------------------------
# Kernel 1: cross-entropy, channels-first (B, C, S).
#   classes on sublanes, items on lanes; grid = (B, cdiv(S, tile_s)).
#   Per-batch partial (sum, count) written to a lane-dense (1, 128) block so the
#   batch axis can run "parallel" (both v7x TensorCores); reduced in the wrapper.
# ----------------------------------------------------------------------------
def _ce_cf_kernel(logits_ref, tgt_ref, out_ref, acc_ref, cnt_ref=None, *,
                  s_total, tile_s, ignore_index):
    si = pl.program_id(1)

    @pl.when(si == 0)
    def _init():
        acc_ref[...] = jnp.zeros_like(acc_ref)
        if cnt_ref is not None:
            cnt_ref[...] = jnp.zeros_like(cnt_ref)

    logits = logits_ref[0].astype(jnp.float32)          # (C, TILE_S)
    tgt = tgt_ref[0]                                    # (1, TILE_S) int32
    c = logits.shape[0]

    col_max = jnp.max(logits, axis=0, keepdims=True)                      # (1, TILE_S)
    lse = col_max + jnp.log(jnp.sum(jnp.exp(logits - col_max), axis=0, keepdims=True))
    cls_ids = jax.lax.broadcasted_iota(jnp.int32, (c, tile_s), 0)
    tgt_logit = jnp.sum(jnp.where(cls_ids == tgt, logits, 0.0), axis=0, keepdims=True)
    ce = lse - tgt_logit                                                  # (1, TILE_S)

    # Mask the trailing partial block (no padding pass in HBM) and ignored targets.
    col_ids = jax.lax.broadcasted_iota(jnp.int32, (1, tile_s), 1) + si * tile_s
    valid = col_ids < s_total
    if cnt_ref is not None:
        valid = jnp.logical_and(valid, tgt != ignore_index)
        cnt_ref[...] += valid.astype(jnp.float32)
    acc_ref[...] += jnp.where(valid, ce, 0.0)

    @pl.when(si == pl.num_programs(1) - 1)
    def _flush():
        lane = jax.lax.broadcasted_iota(jnp.int32, (1, 128), 1)
        total = jnp.sum(acc_ref[...])
        cnt = jnp.sum(cnt_ref[...]) if cnt_ref is not None else jnp.float32(0)
        out_ref[0] = jnp.where(lane == 0, total, jnp.where(lane == 1, cnt, 0.0))


def _ce_channels_first(logits_bcs, targets_bs, *, ignore_index=-100, tile_cols=None):
    b, c, s = logits_bcs.shape
    need_count = ignore_index >= 0
    isz = logits_bcs.dtype.itemsize

    # Physical bytes per lane-column: logits (2 buffers, sublane-padded class axis),
    # int32 targets (2 buffers, sublane-padded to 8), f32 accumulator(s).
    per_col = (2 * _round_up(c, 8) * isz
               + 2 * 8 * 4
               + (2 if need_count else 1) * 8 * 4)
    tile_s = _pick_lane_tile(s, per_col, cap=tile_cols)
    n_tiles = _cdiv(s, tile_s)

    tgt = targets_bs.astype(jnp.int32).reshape(b, 1, s)
    kernel = functools.partial(_ce_cf_kernel, s_total=s, tile_s=tile_s,
                               ignore_index=ignore_index)
    scratch = [pltpu.VMEM((1, tile_s), jnp.float32)]
    if need_count:
        scratch.append(pltpu.VMEM((1, tile_s), jnp.float32))

    out = pl.pallas_call(
        kernel,
        out_shape=jax.ShapeDtypeStruct((b, 1, 128), jnp.float32),
        grid_spec=pltpu.PrefetchScalarGridSpec(
            num_scalar_prefetch=0,
            grid=(b, n_tiles),
            in_specs=[
                pl.BlockSpec((1, c, tile_s), lambda bi, si: (bi, 0, si)),
                pl.BlockSpec((1, 1, tile_s), lambda bi, si: (bi, 0, si)),
            ],
            out_specs=pl.BlockSpec((1, 1, 128), lambda bi, si: (bi, 0, 0)),
            scratch_shapes=scratch,
        ),
        compiler_params=pltpu.CompilerParams(
            dimension_semantics=("parallel", "arbitrary"),
            vmem_limit_bytes=_VMEM_LIMIT_BYTES),
        cost_estimate=pl.CostEstimate(
            flops=6 * b * s * c,
            transcendentals=b * s * (c + 1),
            bytes_accessed=int(logits_bcs.size) * isz + int(tgt.size) * 4 + b * 512),
    )(logits_bcs, tgt)

    total = jnp.sum(out[:, 0, 0])
    if need_count:
        denom = jnp.sum(out[:, 0, 1])   # matches PyTorch: nan/inf if nothing is valid
    else:
        denom = jnp.asarray(b * s, jnp.float32)
    return total / denom


# ----------------------------------------------------------------------------
# Kernel 2: L2 between softmax(mixup) and target_re, channels-first (1, C, M).
#   Per-step column softmax + squared diff reduced over classes (sublanes) into
#   a lane-dense (1, tile_m) accumulator; single lane reduce at the last step.
# ----------------------------------------------------------------------------
def _mixup_cf_kernel(x_ref, t_ref, out_ref, acc_ref, *, m_total, tile_m):
    i = pl.program_id(0)

    @pl.when(i == 0)
    def _init():
        acc_ref[...] = jnp.zeros_like(acc_ref)

    x = x_ref[0].astype(jnp.float32)                    # (C, TILE_M)
    t = t_ref[0].astype(jnp.float32)

    col_max = jnp.max(x, axis=0, keepdims=True)
    e = jnp.exp(x - col_max)
    # approx=False keeps the tight (1e-5) numerics; EUP approx recip is ~12-bit.
    p = e * pl.reciprocal(jnp.sum(e, axis=0, keepdims=True), approx=False)
    d = p - t
    sq = jnp.sum(d * d, axis=0, keepdims=True)          # (1, TILE_M)

    col_ids = jax.lax.broadcasted_iota(jnp.int32, (1, tile_m), 1) + i * tile_m
    acc_ref[...] += jnp.where(col_ids < m_total, sq, 0.0)

    @pl.when(i == pl.num_programs(0) - 1)
    def _flush():
        lane = jax.lax.broadcasted_iota(jnp.int32, (1, 128), 1)
        out_ref[...] = jnp.where(lane == 0, jnp.sum(acc_ref[...]), 0.0)


def _mixup_l2(x_1cm, t_1cm, *, tile_cols=None):
    _, c, m = x_1cm.shape
    per_col = (2 * _round_up(c, 8) * (x_1cm.dtype.itemsize + t_1cm.dtype.itemsize)
               + 8 * 4)
    tile_m = _pick_lane_tile(m, per_col, cap=tile_cols)
    n_tiles = _cdiv(m, tile_m)

    kernel = functools.partial(_mixup_cf_kernel, m_total=m, tile_m=tile_m)
    out = pl.pallas_call(
        kernel,
        out_shape=jax.ShapeDtypeStruct((1, 128), jnp.float32),
        grid_spec=pltpu.PrefetchScalarGridSpec(
            num_scalar_prefetch=0,
            grid=(n_tiles,),
            in_specs=[
                pl.BlockSpec((1, c, tile_m), lambda i: (0, 0, i)),
                pl.BlockSpec((1, c, tile_m), lambda i: (0, 0, i)),
            ],
            out_specs=pl.BlockSpec((1, 128), lambda i: (0, 0)),
            scratch_shapes=[pltpu.VMEM((1, tile_m), jnp.float32)],
        ),
        compiler_params=pltpu.CompilerParams(
            dimension_semantics=("arbitrary",),
            vmem_limit_bytes=_VMEM_LIMIT_BYTES),
        cost_estimate=pl.CostEstimate(
            flops=6 * m * c,
            transcendentals=m * c,
            bytes_accessed=int(x_1cm.size) * x_1cm.dtype.itemsize
                           + int(t_1cm.size) * t_1cm.dtype.itemsize + 512),
    )(x_1cm, t_1cm)
    return out[0, 0] / jnp.asarray(m, jnp.float32)


# ----------------------------------------------------------------------------
# CeL2Loss forward (JAX glue)
# ----------------------------------------------------------------------------
@functools.partial(jax.jit,
                   static_argnames=("ignore_index", "ce_tile", "mixup_tile"))
def ce_l2_loss_forward(inputs, targets, mixup, target_re, *,
                       ignore_index=-100, ce_tile=None, mixup_tile=None):
    loss_ce = jnp.zeros((), jnp.float32)
    loss_mixup = jnp.zeros((), jnp.float32)

    # TODO(synk): vocab-scale class counts need class-axis tiling + online
    # (flash-style) LSE; here the full class axis is assumed to fit in one block.
    if inputs is not None:
        if inputs.ndim > 2:
            # Native (B, C, S) layout: classes on sublanes, spatial on lanes.
            b, c = inputs.shape[0], inputs.shape[1]
            logits_bcs = inputs.reshape(b, c, -1)
            targets_bs = targets.reshape(b, -1)
        else:
            # Flat (N, C): one XLA transpose to (1, C, N) buys full lane occupancy
            # (classes on sublanes) for small C — 4x less EUP/VPU work at C=32.
            logits_bcs = inputs.T[None]
            targets_bs = targets.reshape(1, -1)
        loss_ce = _ce_channels_first(logits_bcs, targets_bs,
                                     ignore_index=ignore_index, tile_cols=ce_tile)

    if mixup is not None:
        c = mixup.shape[-1]
        x_1cm = mixup.reshape(-1, c).T[None]
        t_1cm = target_re.reshape(-1, c).T[None]
        loss_mixup = _mixup_l2(x_1cm, t_1cm, tile_cols=mixup_tile)

    loss = loss_ce + loss_mixup
    return loss, loss_ce, loss_mixup


# ----------------------------------------------------------------------------
# Pure-JAX references for verification
# ----------------------------------------------------------------------------
def _ref_ce(logits2d, targets1d, ignore_index=-100):
    logp = jax.nn.log_softmax(logits2d.astype(jnp.float32), axis=-1)
    nll = -logp[jnp.arange(logits2d.shape[0]), targets1d]
    if ignore_index >= 0:
        msk = targets1d != ignore_index
        return jnp.sum(jnp.where(msk, nll, 0.0)) / jnp.sum(msk)
    return jnp.mean(nll)


def _ref_mixup(mixup2d, target_re2d):
    p = jax.nn.softmax(mixup2d.astype(jnp.float32), axis=-1)
    return jnp.mean(jnp.sum((p - target_re2d.astype(jnp.float32)) ** 2, axis=-1))


if __name__ == "__main__":
    num_classes = 32
    B, H, W = 2, 16, 18          # S = 288: not a multiple of 128 -> partial tail block
    T = 70                       # M = 140: partial tail block for the mixup kernel

    key = jax.random.PRNGKey(0)
    k1, k2, k3, k4, k5, k6 = jax.random.split(key, 6)

    inputs = jax.random.normal(k1, (B, num_classes, H, W), dtype=jnp.float32)
    targets = jax.random.randint(k2, (B, H, W), 0, num_classes, dtype=jnp.int32)
    mixup = jax.random.normal(k3, (B, T, num_classes), dtype=jnp.float32)
    target_re = jax.nn.softmax(
        jax.random.normal(k4, (B, T, num_classes), dtype=jnp.float32), axis=-1)

    # Small tile caps force multi-step accumulating grids at these toy shapes
    # (the production default picks the largest tile within the VMEM budget).
    loss, loss_ce, loss_mixup = ce_l2_loss_forward(
        inputs, targets, mixup, target_re, ce_tile=128, mixup_tile=128)
    jax.block_until_ready((loss, loss_ce, loss_mixup))

    # References (the reference does the PyTorch-style transpose explicitly).
    x2d = jnp.transpose(inputs.reshape(B, num_classes, -1), (0, 2, 1)).reshape(-1, num_classes)
    t1d = targets.reshape(-1)
    ref_ce = _ref_ce(x2d, t1d)
    ref_mix = _ref_mixup(mixup.reshape(-1, num_classes),
                         target_re.reshape(-1, num_classes))
    assert jnp.allclose(loss_ce, ref_ce, atol=1e-5, rtol=1e-5)
    assert jnp.allclose(loss_mixup, ref_mix, atol=1e-5, rtol=1e-5)
    assert jnp.allclose(loss, ref_ce + ref_mix, atol=1e-5, rtol=1e-5)

    # Flat (N, C) logits path + ignore_index >= 0 filtering (multi-tile, masked tail).
    N2 = 300
    logits2 = jax.random.normal(k5, (N2, num_classes), dtype=jnp.float32)
    targets2 = jax.random.randint(k6, (N2,), 0, num_classes, dtype=jnp.int32)
    ign = 5
    loss2, ce2, mix2 = ce_l2_loss_forward(logits2, targets2, mixup, target_re,
                                          ignore_index=ign, ce_tile=128, mixup_tile=128)
    jax.block_until_ready((loss2, ce2, mix2))
    ref_ce2 = _ref_ce(logits2, targets2, ignore_index=ign)
    assert jnp.allclose(ce2, ref_ce2, atol=1e-5, rtol=1e-5)
    assert jnp.allclose(mix2, ref_mix, atol=1e-5, rtol=1e-5)

    print("KERNEL_OK")
</pallas_src>

<mosaic_0001>
module attributes {stable_mosaic.version = 11 : i64} {
  func.func @_ce_cf_kernel(%arg0: i32, %arg1: i32, %arg2: memref<1x32x128xf32, #tpu.memory_space<vmem>>, %arg3: memref<1x1x128xi32, #tpu.memory_space<vmem>>, %arg4: memref<1x1x128xf32, #tpu.memory_space<vmem>>, %arg5: memref<1x128xf32, #tpu.memory_space<vmem>>) attributes {dimension_semantics = [#tpu.dimension_semantics<parallel>, #tpu.dimension_semantics<arbitrary>], iteration_bounds = array<i64: 2, 3>, scalar_prefetch = 0 : i64, scratch_operands = 1 : i64, tpu.core_type = #tpu.core_type<tc>, window_params = [{transform_indices = @transform_0, window_bounds = array<i64: 1, 32, 128>}, {transform_indices = @transform_1, window_bounds = array<i64: 1, 1, 128>}, {transform_indices = @transform_2, window_bounds = array<i64: 1, 1, 128>}]} {
    %c0_i32 = arith.constant 0 : i32
    %0 = arith.cmpi eq, %arg1, %c0_i32 : i32
    %1 = arith.extui %0 : i1 to i32
    %c0_i32_0 = arith.constant 0 : i32
    %2 = arith.cmpi ne, %1, %c0_i32_0 : i32
    scf.if %2 {
      %cst_15 = arith.constant 0.000000e+00 : f32
      %38 = vector.broadcast %cst_15 : f32 to vector<1x128xf32>
      %c0_16 = arith.constant 0 : index
      %c0_17 = arith.constant 0 : index
      %39 = vector.load %arg5[%c0_16, %c0_17] : memref<1x128xf32, #tpu.memory_space<vmem>>, vector<1x128xf32>
      tpu.vector_store %arg5[%c0_16, %c0_17], %38 {strides = array<i32>} : memref<1x128xf32, #tpu.memory_space<vmem>>, vector<1x128xf32>,
    } else {
    }
    %c0 = arith.constant 0 : index
    %c0_1 = arith.constant 0 : index
    %c0_2 = arith.constant 0 : index
    %3 = vector.load %arg2[%c0, %c0_1, %c0_2] : memref<1x32x128xf32, #tpu.memory_space<vmem>>, vector<1x32x128xf32>
    %4 = vector.shape_cast %3 : vector<1x32x128xf32> to vector<32x128xf32>
    %c0_3 = arith.constant 0 : index
    %c0_4 = arith.constant 0 : index
    %c0_5 = arith.constant 0 : index
    %5 = vector.load %arg3[%c0_3, %c0_4, %c0_5] : memref<1x1x128xi32, #tpu.memory_space<vmem>>, vector<1x1x128xi32>
    %6 = vector.shape_cast %5 : vector<1x1x128xi32> to vector<1x128xi32>
    %cst = arith.constant dense<0xFF800000> : vector<128xf32>
    %7 = vector.multi_reduction <maximumf>, %4, %cst [0] : vector<32x128xf32> to vector<128xf32>
    %8 = vector.shape_cast %7 : vector<128xf32> to vector<1x128xf32>
    %9 = vector.broadcast %8 : vector<1x128xf32> to vector<32x128xf32>
    %10 = arith.subf %4, %9 : vector<32x128xf32>
    %11 = math.exp %10 : vector<32x128xf32>
    %cst_6 = arith.constant dense<0.000000e+00> : vector<128xf32>
    %12 = vector.multi_reduction <add>, %11, %cst_6 [0] : vector<32x128xf32> to vector<128xf32>
    %13 = vector.shape_cast %12 : vector<128xf32> to vector<1x128xf32>
    %14 = math.log %13 : vector<1x128xf32>
    %15 = arith.addf %8, %14 : vector<1x128xf32>
    %16 = tpu.iota {dimensions = array<i32: 0>} : vector<32x128xi32>
    %17 = vector.broadcast %6 : vector<1x128xi32> to vector<32x128xi32>
    %18 = arith.cmpi eq, %16, %17 : vector<32x128xi32>
    %cst_7 = arith.constant 0.000000e+00 : f32
    %19 = vector.broadcast %cst_7 : f32 to vector<32x128xf32>
    %20 = arith.select %18, %4, %19 : vector<32x128xi1>, vector<32x128xf32>
    %cst_8 = arith.constant dense<0.000000e+00> : vector<128xf32>
    %21 = vector.multi_reduction <add>, %20, %cst_8 [0] : vector<32x128xf32> to vector<128xf32>
    %22 = vector.shape_cast %21 : vector<128xf32> to vector<1x128xf32>
    %23 = arith.subf %15, %22 : vector<1x128xf32>
    %24 = tpu.iota {dimensions = array<i32: 1>} : vector<1x128xi32>
    %c128_i32 = arith.constant 128 : i32
    %25 = arith.muli %arg1, %c128_i32 : i32
    %26 = vector.broadcast %25 : i32 to vector<1x128xi32>
    %27 = arith.addi %24, %26 : vector<1x128xi32>
    %c288_i32 = arith.constant 288 : i32
    %28 = vector.broadcast %c288_i32 : i32 to vector<1x128xi32>
    %29 = arith.cmpi slt, %27, %28 : vector<1x128xi32>
    %c0_9 = arith.constant 0 : index
    %c0_10 = arith.constant 0 : index
    %30 = vector.load %arg5[%c0_9, %c0_10] : memref<1x128xf32, #tpu.memory_space<vmem>>, vector<1x128xf32>
    %cst_11 = arith.constant 0.000000e+00 : f32
    %31 = vector.broadcast %cst_11 : f32 to vector<1x128xf32>
    %32 = arith.select %29, %23, %31 : vector<1x128xi1>, vector<1x128xf32>
    %33 = arith.addf %30, %32 : vector<1x128xf32>
    %c0_12 = arith.constant 0 : index
    %c0_13 = arith.constant 0 : index
    %34 = vector.load %arg5[%c0_12, %c0_13] : memref<1x128xf32, #tpu.memory_space<vmem>>, vector<1x128xf32>
    tpu.vector_store %arg5[%c0_12, %c0_13], %33 {strides = array<i32>} : memref<1x128xf32, #tpu.memory_space<vmem>>, vector<1x128xf32>,
    %c2_i32 = arith.constant 2 : i32
    %35 = arith.cmpi eq, %arg1, %c2_i32 : i32
    %36 = arith.extui %35 : i1 to i32
    %c0_i32_14 = arith.constant 0 : i32
    %37 = arith.cmpi ne, %36, %c0_i32_14 : i32
    scf.if %37 {
      %38 = tpu.iota {dimensions = array<i32: 1>} : vector<1x128xi32>
      %c0_15 = arith.constant 0 : index
      %c0_16 = arith.constant 0 : index
      %39 = vector.load %arg5[%c0_15, %c0_16] : memref<1x128xf32, #tpu.memory_space<vmem>>, vector<1x128xf32>
      %40 = vector.shape_cast %39 : vector<1x128xf32> to vector<1x1x128xf32>
      %cst_17 = arith.constant dense<0.000000e+00> : vector<1xf32>
      %41 = vector.multi_reduction <add>, %40, %cst_17 [1, 2] : vector<1x1x128xf32> to vector<1xf32>
      %42 = vector.shape_cast %41 : vector<1xf32> to vector<1x1x1xf32>
      %43 = vector.extract %42[0, 0, 0] : f32 from vector<1x1x1xf32>
      %c0_i32_18 = arith.constant 0 : i32
      %44 = vector.broadcast %c0_i32_18 : i32 to vector<1x128xi32>
      %45 = arith.cmpi eq, %38, %44 : vector<1x128xi32>
      %c1_i32 = arith.constant 1 : i32
      %46 = vector.broadcast %c1_i32 : i32 to vector<1x128xi32>
      %47 = arith.cmpi eq, %38, %46 : vector<1x128xi32>
      %cst_19 = arith.constant 0.000000e+00 : f32
      %cst_20 = arith.constant 0.000000e+00 : f32
      %48 = vector.broadcast %cst_19 : f32 to vector<1x128xf32>
      %49 = vector.broadcast %cst_20 : f32 to vector<1x128xf32>
      %50 = arith.select %47, %48, %49 : vector<1x128xi1>, vector<1x128xf32>
      %51 = vector.broadcast %43 : f32 to vector<1x128xf32>
      %52 = arith.select %45, %51, %50 : vector<1x128xi1>, vector<1x128xf32>
      %c0_21 = arith.constant 0 : index
      %c0_22 = arith.constant 0 : index
      %c0_23 = arith.constant 0 : index
      %53 = vector.load %arg4[%c0_21, %c0_22, %c0_23] : memref<1x1x128xf32, #tpu.memory_space<vmem>>, vector<1x1x128xf32>
      %54 = vector.shape_cast %53 : vector<1x1x128xf32> to vector<1x128xf32>
      %55 = vector.shape_cast %52 : vector<1x128xf32> to vector<1x1x128xf32>
      tpu.vector_store %arg4[%c0_21, %c0_22, %c0_23], %55 {strides = array<i32>} : memref<1x1x128xf32, #tpu.memory_space<vmem>>, vector<1x1x128xf32>,
    } else {
    }
    return
  }
  func.func @transform_0(%arg0: i32, %arg1: i32) -> (i32, i32, i32) {
    %c0_i32 = arith.constant 0 : i32
    %c0_i32_0 = arith.constant 0 : i32
    return %arg0, %c0_i32, %arg1 : i32, i32, i32
  }
  func.func @transform_1(%arg0: i32, %arg1: i32) -> (i32, i32, i32) {
    %c0_i32 = arith.constant 0 : i32
    %c0_i32_0 = arith.constant 0 : i32
    return %arg0, %c0_i32, %arg1 : i32, i32, i32
  }
  func.func @transform_2(%arg0: i32, %arg1: i32) -> (i32, i32, i32) {
    %c0_i32 = arith.constant 0 : i32
    %c0_i32_0 = arith.constant 0 : i32
    %c0_i32_1 = arith.constant 0 : i32
    return %arg0, %c0_i32, %c0_i32_0 : i32, i32, i32
  }
}

module attributes {stable_mosaic.version = 11 : i64} {
  func.func @_mixup_cf_kernel(%arg0: i32, %arg1: memref<1x32x128xf32, #tpu.memory_space<vmem>>, %arg2: memref<1x32x128xf32, #tpu.memory_space<vmem>>, %arg3: memref<1x128xf32, #tpu.memory_space<vmem>>, %arg4: memref<1x128xf32, #tpu.memory_space<vmem>>) attributes {dimension_semantics = [#tpu.dimension_semantics<arbitrary>], iteration_bounds = array<i64: 2>, scalar_prefetch = 0 : i64, scratch_operands = 1 : i64, tpu.core_type = #tpu.core_type<tc>, window_params = [{transform_indices = @transform_0, window_bounds = array<i64: 1, 32, 128>}, {transform_indices = @transform_1, window_bounds = array<i64: 1, 32, 128>}, {pipeline_mode = #tpu.pipeline_mode<synchronous>, transform_indices = @transform_2, window_bounds = array<i64: 1, 128>}]} {
    %c0_i32 = arith.constant 0 : i32
    %0 = arith.cmpi eq, %arg0, %c0_i32 : i32
    %1 = arith.extui %0 : i1 to i32
    %c0_i32_0 = arith.constant 0 : i32
    %2 = arith.cmpi ne, %1, %c0_i32_0 : i32
    scf.if %2 {
      %cst_14 = arith.constant 0.000000e+00 : f32
      %35 = vector.broadcast %cst_14 : f32 to vector<1x128xf32>
      %c0_15 = arith.constant 0 : index
      %c0_16 = arith.constant 0 : index
      %36 = vector.load %arg4[%c0_15, %c0_16] : memref<1x128xf32, #tpu.memory_space<vmem>>, vector<1x128xf32>
      tpu.vector_store %arg4[%c0_15, %c0_16], %35 {strides = array<i32>} : memref<1x128xf32, #tpu.memory_space<vmem>>, vector<1x128xf32>,
    } else {
    }
    %c0 = arith.constant 0 : index
    %c0_1 = arith.constant 0 : index
    %c0_2 = arith.constant 0 : index
    %3 = vector.load %arg1[%c0, %c0_1, %c0_2] : memref<1x32x128xf32, #tpu.memory_space<vmem>>, vector<1x32x128xf32>
    %4 = vector.shape_cast %3 : vector<1x32x128xf32> to vector<32x128xf32>
    %c0_3 = arith.constant 0 : index
    %c0_4 = arith.constant 0 : index
    %c0_5 = arith.constant 0 : index
    %5 = vector.load %arg2[%c0_3, %c0_4, %c0_5] : memref<1x32x128xf32, #tpu.memory_space<vmem>>, vector<1x32x128xf32>
    %6 = vector.shape_cast %5 : vector<1x32x128xf32> to vector<32x128xf32>
    %cst = arith.constant dense<0xFF800000> : vector<128xf32>
    %7 = vector.multi_reduction <maximumf>, %4, %cst [0] : vector<32x128xf32> to vector<128xf32>
    %8 = vector.shape_cast %7 : vector<128xf32> to vector<1x128xf32>
    %9 = vector.broadcast %8 : vector<1x128xf32> to vector<32x128xf32>
    %10 = arith.subf %4, %9 : vector<32x128xf32>
    %11 = math.exp %10 : vector<32x128xf32>
    %cst_6 = arith.constant dense<0.000000e+00> : vector<128xf32>
    %12 = vector.multi_reduction <add>, %11, %cst_6 [0] : vector<32x128xf32> to vector<128xf32>
    %13 = vector.shape_cast %12 : vector<128xf32> to vector<1x128xf32>
    %14 = tpu.reciprocal %13 : vector<1x128xf32> -> vector<1x128xf32>
    %15 = vector.broadcast %14 : vector<1x128xf32> to vector<32x128xf32>
    %16 = arith.mulf %11, %15 : vector<32x128xf32>
    %17 = arith.subf %16, %6 : vector<32x128xf32>
    %18 = arith.mulf %17, %17 : vector<32x128xf32>
    %cst_7 = arith.constant dense<0.000000e+00> : vector<128xf32>
    %19 = vector.multi_reduction <add>, %18, %cst_7 [0] : vector<32x128xf32> to vector<128xf32>
    %20 = vector.shape_cast %19 : vector<128xf32> to vector<1x128xf32>
    %21 = tpu.iota {dimensions = array<i32: 1>} : vector<1x128xi32>
    %c128_i32 = arith.constant 128 : i32
    %22 = arith.muli %arg0, %c128_i32 : i32
    %23 = vector.broadcast %22 : i32 to vector<1x128xi32>
    %24 = arith.addi %21, %23 : vector<1x128xi32>
    %c0_8 = arith.constant 0 : index
    %c0_9 = arith.constant 0 : index
    %25 = vector.load %arg4[%c0_8, %c0_9] : memref<1x128xf32, #tpu.memory_space<vmem>>, vector<1x128xf32>
    %c140_i32 = arith.constant 140 : i32
    %26 = vector.broadcast %c140_i32 : i32 to vector<1x128xi32>
    %27 = arith.cmpi slt, %24, %26 : vector<1x128xi32>
    %cst_10 = arith.constant 0.000000e+00 : f32
    %28 = vector.broadcast %cst_10 : f32 to vector<1x128xf32>
    %29 = arith.select %27, %20, %28 : vector<1x128xi1>, vector<1x128xf32>
    %30 = arith.addf %25, %29 : vector<1x128xf32>
    %c0_11 = arith.constant 0 : index
    %c0_12 = arith.constant 0 : index
    %31 = vector.load %arg4[%c0_11, %c0_12] : memref<1x128xf32, #tpu.memory_space<vmem>>, vector<1x128xf32>
    tpu.vector_store %arg4[%c0_11, %c0_12], %30 {strides = array<i32>} : memref<1x128xf32, #tpu.memory_space<vmem>>, vector<1x128xf32>,
    %c1_i32 = arith.constant 1 : i32
    %32 = arith.cmpi eq, %arg0, %c1_i32 : i32
    %33 = arith.extui %32 : i1 to i32
    %c0_i32_13 = arith.constant 0 : i32
    %34 = arith.cmpi ne, %33, %c0_i32_13 : i32
    scf.if %34 {
      %35 = tpu.iota {dimensions = array<i32: 1>} : vector<1x128xi32>
      %c0_i32_14 = arith.constant 0 : i32
      %36 = vector.broadcast %c0_i32_14 : i32 to vector<1x128xi32>
      %37 = arith.cmpi eq, %35, %36 : vector<1x128xi32>
      %c0_15 = arith.constant 0 : index
      %c0_16 = arith.constant 0 : index
      %38 = vector.load %arg4[%c0_15, %c0_16] : memref<1x128xf32, #tpu.memory_space<vmem>>, vector<1x128xf32>
      %39 = vector.shape_cast %38 : vector<1x128xf32> to vector<1x1x128xf32>
      %cst_17 = arith.constant dense<0.000000e+00> : vector<1xf32>
      %40 = vector.multi_reduction <add>, %39, %cst_17 [1, 2] : vector<1x1x128xf32> to vector<1xf32>
      %41 = vector.shape_cast %40 : vector<1xf32> to vector<1x1x1xf32>
      %42 = vector.extract %41[0, 0, 0] : f32 from vector<1x1x1xf32>
      %cst_18 = arith.constant 0.000000e+00 : f32
      %43 = vector.broadcast %42 : f32 to vector<1x128xf32>
      %44 = vector.broadcast %cst_18 : f32 to vector<1x128xf32>
      %45 = arith.select %37, %43, %44 : vector<1x128xi1>, vector<1x128xf32>
      %c0_19 = arith.constant 0 : index
      %c0_20 = arith.constant 0 : index
      %46 = vector.load %arg3[%c0_19, %c0_20] : memref<1x128xf32, #tpu.memory_space<vmem>>, vector<1x128xf32>
      tpu.vector_store %arg3[%c0_19, %c0_20], %45 {strides = array<i32>} : memref<1x128xf32, #tpu.memory_space<vmem>>, vector<1x128xf32>,
    } else {
    }
    return
  }
  func.func @transform_0(%arg0: i32) -> (i32, i32, i32) {
    %c0_i32 = arith.constant 0 : i32
    %c0_i32_0 = arith.constant 0 : i32
    %c0_i32_1 = arith.constant 0 : i32
    return %c0_i32, %c0_i32_0, %arg0 : i32, i32, i32
  }
  func.func @transform_1(%arg0: i32) -> (i32, i32, i32) {
    %c0_i32 = arith.constant 0 : i32
    %c0_i32_0 = arith.constant 0 : i32
    %c0_i32_1 = arith.constant 0 : i32
    return %c0_i32, %c0_i32_0, %arg0 : i32, i32, i32
  }
  func.func @transform_2(%arg0: i32) -> (i32, i32) {
    %c0_i32 = arith.constant 0 : i32
    %c0_i32_0 = arith.constant 0 : i32
    %c0_i32_1 = arith.constant 0 : i32
    return %c0_i32, %c0_i32_0 : i32, i32
  }
}

</mosaic_0001>

<llo_original>
// kernel: ce_l2_loss_forward.2
$region0: #{ce_l2_loss_forward.2}
  #allocation0 [shape = 'u32[]', space=smem, size = 0x4, offset = 0x4, fixed_abs, tag = 'smem constant byte address 0x4 - core index']
  #allocation1 [shape = 'u32[144,128]{1,0:T(1,128)}', space=vmem, size = 0x12000, scoped, tag = 'internal scratch']
  #allocation2 [shape = 'f32[1,128]{1,0:T(1,128)}', space=vmem, size = 0x200, scoped, tag = 'scratch operand']
  %s0 = inlined_call_operand.vmem [shape: f32[2,32,288], index: 0, kind: input, shape index: {}]
  %s1 = inlined_call_operand.vmem [shape: s32[2,1,288], index: 1, kind: input, shape index: {}]
  %s2 = inlined_call_operand.vmem [shape: f32[2,1,128], index: 2, kind: output, shape index: {}]
  %s3 = sld [smem:[#allocation0]]
  $region87: #{ce_l2_loss_forward.2} parent=0
    _
  %s5 = ssub.s32 1, %s3
  %s6 = scalar_select 0, %s5, %s3
  $region1: #{ce_l2_loss_forward.2} parent=0
    #allocation3 [shape = 'u8[32768]{0}', space=vmem, size = 0x8000, scoped, tag = 'input window, operand 0']
    loop: start=0, step=1, limit=8
    $region2: #{ce_l2_loss_forward.2} parent=1 // loop_pre_header
      _
    $region3: #{ce_l2_loss_forward.2} parent=1 // loop_header
      %s8 = sphi 0, %s12
      %p9 = scmp.ge.s32.totalorder %s8, 8
      %s15 = sphi 0, %s27
      %s16 = sphi 0, %s23
      %s17 = sphi 0, %s15
      %s18 = sphi 0, %s16
      %s19 = sphi 0, %s17
      %s20 = sphi 0, %s18
      %s32 = sphi 0, %s34
      %s35 = sphi 0, %s32
      %s36 = sphi 0, %s35
      %s52 = sphi 0, %s36
      %s60 = sphi 0, %s62
      %s63 = sphi 0, %s60
      %s64 = sphi 0, %s63
      %s80 = sphi 0, %s64
      %s86 = sphi 0, %s88
      %s89 = sphi 0, %s86
      %s90 = sphi 0, %s89
      %s106 = sphi 0, %s90
    $region4: #{ce_l2_loss_forward.2} parent=1 // loop_header_branch
      %11 = sbr.rel (%p9) target = $region8
    $region5: #{ce_l2_loss_forward.2} parent=1 // loop_body
      %s13 = ssub.s32 %s8, 1
      %s14 = ssub.s32 %s8, 2
      %s21 = sadd.s32 1, %s16
      %p22 = scmp.ge.s32.totalorder %s21, 3
      %s23 = scalar_select %p22, 0, %s21
      %s24 = sadd.s32 1, %s15
      %s25 = scalar_select %p22, %s24, %s15
      %p26 = scmp.ge.s32.totalorder %s25, 2
      %s27 = scalar_select %p26, 0, %s25
      %s28 = ssub.s32 %s15, %s27
      %s29 = ssub.s32 %s16, %s23
      %s30 = sor.u32 %s28, %s29
      %p31 = scmp.eq.s32.totalorder %s30, 0
      %s33 = sadd.s32 %s32, 1
      %s34 = scalar_select %p31, %s32, %s33
      %p37 = pneg %p31
      %p38 = scmp.eq.s32.totalorder %s8, 5
      %p39 = por %p37, %p38
      %p40 = scmp.ne.s32.totalorder %s32, %s35
      %p41 = scmp.eq.s32.totalorder %s8, 0
      %p42 = por %p40, %p41
      %p43 = scmp.ne.s32.totalorder %s32, %s35
      %p44 = scmp.eq.s32.totalorder %s13, 5
      %p45 = por %p43, %p44
      %p46 = scmp.ne.s32.totalorder %s35, %s36
      %p47 = scmp.eq.s32.totalorder %s13, 0
      %p48 = por %p46, %p47
      %p49 = scmp.ne.s32.totalorder %s35, %s36
      %p50 = scmp.eq.s32.totalorder %s14, 5
      %p51 = por %p49, %p50
      %p53 = scmp.ne.s32.totalorder %s36, %s52
      %p54 = scmp.eq.s32.totalorder %s14, 0
      %p55 = por %p53, %p54
      %s56 = ssub.s32 %s15, %s27
      %s57 = ssub.s32 %s16, %s23
      %s58 = sor.u32 %s56, %s57
      %p59 = scmp.eq.s32.totalorder %s58, 0
      %s61 = sadd.s32 %s60, 1
      %s62 = scalar_select %p59, %s60, %s61
      %p65 = pneg %p59
      %p66 = scmp.eq.s32.totalorder %s8, 5
      %p67 = por %p65, %p66
      %p68 = scmp.ne.s32.totalorder %s60, %s63
      %p69 = scmp.eq.s32.totalorder %s8, 0
      %p70 = por %p68, %p69
      %p71 = scmp.ne.s32.totalorder %s60, %s63
      %p72 = scmp.eq.s32.totalorder %s13, 5
      %p73 = por %p71, %p72
      %p74 = scmp.ne.s32.totalorder %s63, %s64
      %p75 = scmp.eq.s32.totalorder %s13, 0
      %p76 = por %p74, %p75
      %p77 = scmp.ne.s32.totalorder %s63, %s64
      %p78 = scmp.eq.s32.totalorder %s14, 5
      %p79 = por %p77, %p78
      %p81 = scmp.ne.s32.totalorder %s64, %s80
      %p82 = scmp.eq.s32.totalorder %s14, 0
      %p83 = por %p81, %p82
      %s84 = ssub.s32 %s15, %s27
      %p85 = scmp.eq.s32.totalorder %s84, 0
      %s87 = sadd.s32 %s86, 1
      %s88 = scalar_select %p85, %s86, %s87
      %p91 = pneg %p85
      %p92 = scmp.eq.s32.totalorder %s8, 5
      %p93 = por %p91, %p92
      %p94 = scmp.ne.s32.totalorder %s86, %s89
      %p95 = scmp.eq.s32.totalorder %s8, 0
      %p96 = por %p94, %p95
      %p97 = scmp.ne.s32.totalorder %s86, %s89
      %p98 = scmp.eq.s32.totalorder %s13, 5
      %p99 = por %p97, %p98
      %p100 = scmp.ne.s32.totalorder %s89, %s90
      %p101 = scmp.eq.s32.totalorder %s13, 0
      %p102 = por %p100, %p101
      %p103 = scmp.ne.s32.totalorder %s89, %s90
      %p104 = scmp.eq.s32.totalorder %s14, 5
      %p105 = por %p103, %p104
      %p107 = scmp.ne.s32.totalorder %s90, %s106
      %p108 = scmp.eq.s32.totalorder %s14, 0
      %p109 = por %p107, %p108
      %p110 = scmp.le.s32.totalorder 1, %s8
      %p111 = scmp.lt.s32.totalorder %s8, 7
      %p112 = pnand %p110, %p111
      %p113 = pneg %p112
      // Predicated region
      $region9: #{ce_l2_loss_forward.2} parent=5 // pred_check
        _
      $region10: #{ce_l2_loss_forward.2} parent=5 // pred_check_branch
        %115 = sbr.rel (%p112) target = $region12
      $region11: #{ce_l2_loss_forward.2} parent=5 // pred_region
        %s116 = ssub.s32 %s8, 1
      $region12: #{ce_l2_loss_forward.2} parent=5 // pred_fallthru
        _
      %p117 = scmp.lt.s32.totalorder %s8, 6
      // Predicated region
      $region13: #{ce_l2_loss_forward.2} parent=5 // pred_check
        %p118 = pneg %p117
      $region14: #{ce_l2_loss_forward.2} parent=5 // pred_check_branch
        %120 = sbr.rel (%p118) target = $region16
      $region15: #{ce_l2_loss_forward.2} parent=5 // pred_region
        // Predicated region
        $region17: #{ce_l2_loss_forward.2} parent=15 // pred_check
          %p121 = pneg %p42
        $region18: #{ce_l2_loss_forward.2} parent=15 // pred_check_branch
          %123 = sbr.rel (%p121) target = $region20
        $region19: #{ce_l2_loss_forward.2} parent=15 // pred_region
          %s124 = sand.u32 %s32, 1
          %s125 = sand.u32 %s32, 1
          %s126 = smul.addr %s125, 32
          %s127 = scalar_lea.vmem [#allocation3], %s126
          %s128 = smul.addr %s15, 12
          %s129 = sadd.s32 %s16, %s128
          %s130 = smul.addr %s129, 8
          %s131 = scalar_lea.vmem %s0, %s130
          // Predicated region
          $region21: #{ce_l2_loss_forward.2} parent=19 // pred_check
            _
          $region22: #{ce_l2_loss_forward.2} parent=19 // pred_check_branch
            %133 = sbr.rel (0) target = $region24
          $region23: #{ce_l2_loss_forward.2} parent=19 // pred_region
            // Predicated region
            $region25: #{ce_l2_loss_forward.2} parent=23 // pred_check
              _
            $region26: #{ce_l2_loss_forward.2} parent=23 // pred_check_branch
              %135 = sbr.rel (0) target = $region28
            $region27: #{ce_l2_loss_forward.2} parent=23 // pred_region
              // Predicated region
              $region40: #{ce_l2_loss_forward.2} parent=27 // pred_check
                _
              $region41: #{ce_l2_loss_forward.2} parent=27 // pred_check_branch
                %157 = sbr.rel (0) target = $region43
              $region42: #{ce_l2_loss_forward.2} parent=27 // pred_region
                loop: start=0, step=1, limit=1
                $region44: #{ce_l2_loss_forward.2} parent=42 // loop_pre_header
                  _
                $region45: #{ce_l2_loss_forward.2} parent=42 // loop_header
                  %s159 = sphi 0, %s163
                  %p160 = scmp.ge.s32.totalorder %s159, 1
                  %s164 = sphi %s131, %s131
                  %s165 = sphi %s127, %s127
                $region46: #{ce_l2_loss_forward.2} parent=42 // loop_header_branch
                  %162 = sbr.rel (%p160) target = $region50
                $region47: #{ce_l2_loss_forward.2} parent=42 // loop_body
                  %v166 = vld [vmem:[%s164] sm:$0xff]
                  %167 = vst [vmem:[%s165] sm:$0xff] %v166
                  %v168 = vld [vmem:[%s164 + $0x18] sm:$0xff]
                  %169 = vst [vmem:[%s165 + $0x8] sm:$0xff] %v168
                  %v170 = vld [vmem:[%s164 + $0x30] sm:$0xff]
                  %171 = vst [vmem:[%s165 + $0x10] sm:$0xff] %v170
                  %v172 = vld [vmem:[%s164 + $0x48] sm:$0xff]
                  %173 = vst [vmem:[%s165 + $0x18] sm:$0xff] %v172
                $region48: #{ce_l2_loss_forward.2} parent=42 // loop_footer
                  %s163 = sadd.s32 1, %s159
                $region49: #{ce_l2_loss_forward.2} parent=42 // loop_footer_branch
                  %158 = sbr.rel target = $region45
                $region50: #{ce_l2_loss_forward.2} parent=42 // loop_exit
                  _
              $region43: #{ce_l2_loss_forward.2} parent=27 // pred_fallthru
                _
              // Predicated region
              $region51: #{ce_l2_loss_forward.2} parent=27 // pred_check
                _
              $region52: #{ce_l2_loss_forward.2} parent=27 // pred_check_branch
                %175 = sbr.rel target = $region54
              $region53: #{ce_l2_loss_forward.2} parent=27 // pred_region
                _
              $region54: #{ce_l2_loss_forward.2} parent=27 // pred_fallthru
                _
            $region28: #{ce_l2_loss_forward.2} parent=23 // pred_fallthru
              _
            // Predicated region
            $region29: #{ce_l2_loss_forward.2} parent=23 // pred_check
              _
            $region30: #{ce_l2_loss_forward.2} parent=23 // pred_check_branch
              %137 = sbr.rel target = $region32
            $region31: #{ce_l2_loss_forward.2} parent=23 // pred_region
              %s139 = ssub.s32 256, 1
              loop: start=0, step=1, limit=1
              $region33: #{ce_l2_loss_forward.2} parent=31 // loop_pre_header
                _
              $region34: #{ce_l2_loss_forward.2} parent=31 // loop_header
                %s141 = sphi 0, %s145
                %p142 = scmp.ge.s32.totalorder %s141, 1
                %s146 = sphi %s131, %s131
                %s147 = sphi %s127, %s127
              $region35: #{ce_l2_loss_forward.2} parent=31 // loop_header_branch
                %144 = sbr.rel (%p142) target = $region39
              $region36: #{ce_l2_loss_forward.2} parent=31 // loop_body
                %v148 = vld [vmem:[%s146] sm:%s139]
                %149 = vst [vmem:[%s147] sm:%s139] %v148
                %v150 = vld [vmem:[%s146 + $0x18] sm:%s139]
                %151 = vst [vmem:[%s147 + $0x8] sm:%s139] %v150
                %v152 = vld [vmem:[%s146 + $0x30] sm:%s139]
                %153 = vst [vmem:[%s147 + $0x10] sm:%s139] %v152
                %v154 = vld [vmem:[%s146 + $0x48] sm:%s139]
                %155 = vst [vmem:[%s147 + $0x18] sm:%s139] %v154
              $region37: #{ce_l2_loss_forward.2} parent=31 // loop_footer
                %s145 = sadd.s32 1, %s141
              $region38: #{ce_l2_loss_forward.2} parent=31 // loop_footer_branch
                %140 = sbr.rel target = $region34
              $region39: #{ce_l2_loss_forward.2} parent=31 // loop_exit
                _
            $region32: #{ce_l2_loss_forward.2} parent=23 // pred_fallthru
              _
          $region24: #{ce_l2_loss_forward.2} parent=19 // pred_fallthru
            _
          %176 = vnop
        $region20: #{ce_l2_loss_forward.2} parent=15 // pred_fallthru
          _
        // Predicated region
        $region55: #{ce_l2_loss_forward.2} parent=15 // pred_check
          %p177 = pneg %p70
        $region56: #{ce_l2_loss_forward.2} parent=15 // pred_check_branch
          %179 = sbr.rel (%p177) target = $region58
        $region57: #{ce_l2_loss_forward.2} parent=15 // pred_region
          %p180 = scmp.lt.s32.totalorder %s15, 1
          %s181 = scalar_select %p180, %s15, 1
          %p182 = scmp.lt.s32.totalorder %s16, 2
          %s183 = scalar_select %p182, %s16, 2
          %s184 = smul.addr %s181, 3
          %s185 = sadd.s32 %s183, %s184
          %s186 = scalar_lea.vmem %s1, %s185
        $region58: #{ce_l2_loss_forward.2} parent=15 // pred_fallthru
          _
      $region16: #{ce_l2_loss_forward.2} parent=5 // pred_fallthru
        _
      %p187 = scmp.le.s32.totalorder 1, %s8
      %p188 = scmp.lt.s32.totalorder %s8, 7
      %p189 = pnand %p187, %p188
      %p190 = pneg %p189
      // Predicated region
      $region59: #{ce_l2_loss_forward.2} parent=5 // pred_check
        _
      $region60: #{ce_l2_loss_forward.2} parent=5 // pred_check_branch
        %192 = sbr.rel (%p189) target = $region62
      $region61: #{ce_l2_loss_forward.2} parent=5 // pred_region
        %s193 = ssub.s32 %s8, 1
        %s194 = sand.u32 %s35, 1
        %s195 = sand.u32 %s35, 1
        %s196 = smul.addr %s195, 32
        %s197 = scalar_lea.vmem [#allocation3], %s196
        // Predicated region
        $region63: #{ce_l2_loss_forward.2} parent=61 // pred_check
          %p198 = pneg %p48
        $region64: #{ce_l2_loss_forward.2} parent=61 // pred_check_branch
          %200 = sbr.rel (%p198) target = $region66
        $region65: #{ce_l2_loss_forward.2} parent=61 // pred_region
          _
        $region66: #{ce_l2_loss_forward.2} parent=61 // pred_fallthru
          _
        %s201 = sand.u32 %s35, 1
        %s202 = sand.u32 %s35, 1
        %s203 = smul.addr %s202, 32
        %s204 = scalar_lea.vmem [#allocation3], %s203
        %p205 = pneg %p48
        %p206 = pneg %p45
        %p207 = scmp.lt.s32.totalorder %s17, 1
        %s208 = scalar_select %p207, %s17, 1
        %p209 = scmp.lt.s32.totalorder %s18, 2
        %s210 = scalar_select %p209, %s18, 2
        %s211 = smul.addr %s208, 3
        %s212 = sadd.s32 %s210, %s211
        %s213 = scalar_lea.vmem %s1, %s212
        %p214 = pneg %p76
        %p215 = pneg %p73
        %p216 = pneg %p102
        %p217 = pneg %p99
        %p218 = scmp.lt.s32.totalorder %s17, 1
        %s219 = scalar_select %p218, %s17, 1
        %s220 = scalar_lea.vmem %s2, %s219
        %p221 = scmp.lt.s32.totalorder %s17, 1
        %s222 = scalar_select %p221, %s17, 1
        %p223 = scmp.lt.s32.totalorder %s18, 2
        %s224 = scalar_select %p223, %s18, 2
        %s225 = smul.addr %s222, 3
        %s226 = sadd.s32 %s224, %s225
        %s227 = scalar_lea.vmem %s1, %s226
        %p228 = scmp.lt.s32.totalorder %s17, 1
        %s229 = scalar_select %p228, %s17, 1
        %s230 = scalar_lea.vmem %s2, %s229
        %p231 = scmp.eq.s32.totalorder %s18, 0
        // Predicated region
        $region67: #{ce_l2_loss_forward.2} parent=61 // pred_check
          %p232 = pneg %p231
        $region68: #{ce_l2_loss_forward.2} parent=61 // pred_check_branch
          %234 = sbr.rel (%p232) target = $region70
        $region69: #{ce_l2_loss_forward.2} parent=61 // pred_region
          %235 = vst [vmem:[#allocation2] sm:$0x1] 0.0
        $region70: #{ce_l2_loss_forward.2} parent=61 // pred_fallthru
          _
        %v236 = vld [vmem:[%s197] sm:$0xff]
        %v237 = vld [vmem:[%s197 + $0x8] sm:$0xff]
        %v238 = vld [vmem:[%s197 + $0x10] sm:$0xff]
        %v239 = vld [vmem:[%s197 + $0x18] sm:$0xff]
        %v240 = vld [vmem:[%s227] sm:$0x1]
        %v241 = vmax.f32 %v236, %v237
        %v242 = vmax.f32 %v238, %v239
        %v243 = vmax.f32 %v241, %v242
        %v244 = vrot.slane %v243, 4
        %v245 = vmax.f32 %v243, %v244
        %v246 = vrot.slane %v245, 2
        %v247 = vmax.f32 %v245, %v246
        %v248 = vrot.slane %v247, 1
        %v249 = vmax.f32 %v247, %v248
        %v250 = vsub.f32 %v236, %v249
        %v251 = vsub.f32 %v237, %v249
        %v252 = vsub.f32 %v238, %v249
        %v253 = vsub.f32 %v239, %v249
        %v254 = vmul.f32 %v250, 1.442695
        %v255 = vpow.pop %v254
        %v256 = vmul.f32 %v251, 1.442695
        %v257 = vpow.pop %v256
        %v258 = vmul.f32 %v252, 1.442695
        %v259 = vpow.pop %v258
        %v260 = vmul.f32 %v253, 1.442695
        %v261 = vpow.pop %v260
        %v262 = vadd.f32 %v255, %v257
        %v263 = vadd.f32 %v262, %v259
        %v264 = vadd.f32 %v263, %v261
        %v265 = vrot.slane %v264, 4
        %v266 = vadd.f32 %v264, %v265
        %v267 = vrot.slane %v266, 2
        %v268 = vadd.f32 %v266, %v267
        %v269 = vrot.slane %v268, 1
        %v270 = vadd.f32 %v268, %v269
        %v271 = vlog2.pop %v270
        %v272 = vmul.f32 %v271, 0.6931472
        %v273 = vadd.f32 %v249, %v272
        %v274 = vlaneseq
        %v275 = vshrl.u32 %v274, 7
        %v276 = vadd.s32 %v275, 8
        %v277 = vadd.s32 %v275, 16
        %v278 = vadd.s32 %v275, 24
        %v279 = vlaneseq
        %v280 = vshrl.u32 %v279, 7
        %v281 = vsub.s32 0, %v280
        %v282 = vrot.slane %v240, %v281
        %vm283 = vcmp.eq.s32.totalorder %v275, %v282
        %vm284 = vcmp.eq.s32.totalorder %v276, %v282
        %vm285 = vcmp.eq.s32.totalorder %v277, %v282
        %vm286 = vcmp.eq.s32.totalorder %v278, %v282
        %v287 = vsel %vm283, %v236, 0.0
        %v288 = vsel %vm284, %v237, 0.0
        %v289 = vsel %vm285, %v238, 0.0
        %v290 = vsel %vm286, %v239, 0.0
        %v291 = vadd.f32 %v287, %v288
        %v292 = vadd.f32 %v291, %v289
        %v293 = vadd.f32 %v292, %v290
        %v294 = vrot.slane %v293, 4
        %v295 = vadd.f32 %v293, %v294
        %v296 = vrot.slane %v295, 2
        %v297 = vadd.f32 %v295, %v296
        %v298 = vrot.slane %v297, 1
        %v299 = vadd.f32 %v297, %v298
        %v300 = vsub.f32 %v273, %v299
        %v301 = vlaneseq
        %v302 = vand.u32 %v301, 127
        %s303 = smul.u32 %s18, 128
        %v304 = vstv %s303
        %v305 = vadd.s32 %v302, %v304
        %vm306 = vcmp.lt.s32.totalorder %v305, 288
        %v307 = vld [vmem:[#allocation2] sm:$0x1]
        %v308 = vsel %vm306, %v300, 0.0
        %v309 = vadd.f32 %v307, %v308
        %310 = vst [vmem:[#allocation2] sm:$0x1] %v309
        %p311 = scmp.eq.s32.totalorder %s18, 2
        // Predicated region
        $region71: #{ce_l2_loss_forward.2} parent=61 // pred_check
          %p312 = pneg %p311
        $region72: #{ce_l2_loss_forward.2} parent=61 // pred_check_branch
          %314 = sbr.rel (%p312) target = $region74
        $region73: #{ce_l2_loss_forward.2} parent=61 // pred_region
          %v315 = vld [vmem:[#allocation2] sm:$0x1]
          %vm316 = vcmask 1040384
          %v317 = vsel %vm316, %v315, 0.0
          %318 = vadd.xlane.f32.xlu0 %v317
          %v319 = vpop.xlane.xlu0 %318
          %v320 = vrot.slane %v319, 4
          %v321 = vadd.f32 %v319, %v320
          %v322 = vrot.slane %v321, 2
          %v323 = vadd.f32 %v321, %v322
          %v324 = vrot.slane %v323, 1
          %v325 = vadd.f32 %v323, %v324
          %s326 = vtos %v325
          %vm327 = vcmp.eq.s32.totalorder %v302, 0
          %v328 = vstv %s326
          %v329 = vsel %vm327, %v328, 0.0
          %330 = vst [vmem:[%s230] sm:$0x1] %v329
        $region74: #{ce_l2_loss_forward.2} parent=61 // pred_fallthru
          _
        %p331 = scmp.lt.s32.totalorder %s17, 1
        %s332 = scalar_select %p331, %s17, 1
        %s333 = scalar_lea.vmem %s2, %s332
        // Predicated region
        $region75: #{ce_l2_loss_forward.2} parent=61 // pred_check
          %p334 = pneg %p99
        $region76: #{ce_l2_loss_forward.2} parent=61 // pred_check_branch
          %336 = sbr.rel (%p334) target = $region78
        $region77: #{ce_l2_loss_forward.2} parent=61 // pred_region
          _
        $region78: #{ce_l2_loss_forward.2} parent=61 // pred_fallthru
          _
      $region62: #{ce_l2_loss_forward.2} parent=5 // pred_fallthru
        _
      %p337 = scmp.le.s32.totalorder 2, %s8
      // Predicated region
      $region79: #{ce_l2_loss_forward.2} parent=5 // pred_check
        %p338 = pneg %p337
      $region80: #{ce_l2_loss_forward.2} parent=5 // pred_check_branch
        %340 = sbr.rel (%p338) target = $region82
      $region81: #{ce_l2_loss_forward.2} parent=5 // pred_region
        %s341 = ssub.s32 %s8, 2
        // Predicated region
        $region83: #{ce_l2_loss_forward.2} parent=81 // pred_check
          %p342 = pneg %p105
        $region84: #{ce_l2_loss_forward.2} parent=81 // pred_check_branch
          %344 = sbr.rel (%p342) target = $region86
        $region85: #{ce_l2_loss_forward.2} parent=81 // pred_region
          %p345 = scmp.lt.s32.totalorder %s19, 1
          %s346 = scalar_select %p345, %s19, 1
          %s347 = scalar_lea.vmem %s2, %s346
        $region86: #{ce_l2_loss_forward.2} parent=81 // pred_fallthru
          _
      $region82: #{ce_l2_loss_forward.2} parent=5 // pred_fallthru
        _
    $region6: #{ce_l2_loss_forward.2} parent=1 // loop_footer
      %s12 = sadd.s32 1, %s8
    $region7: #{ce_l2_loss_forward.2} parent=1 // loop_footer_branch
      %7 = sbr.rel target = $region3
    $region8: #{ce_l2_loss_forward.2} parent=1 // loop_exit
      _

// kernel: ce_l2_loss_forward.3
$region0: #{ce_l2_loss_forward.3}
  #allocation0 [shape = 'u32[]', space=smem, size = 0x4, offset = 0x4, fixed_abs, tag = 'smem constant byte address 0x4 - core index']
  #allocation1 [shape = 'u32[144,128]{1,0:T(1,128)}', space=vmem, size = 0x12000, scoped, tag = 'internal scratch']
  #allocation2 [shape = 'f32[1,128]{1,0:T(1,128)}', space=vmem, size = 0x200, scoped, tag = 'scratch operand']
  %s0 = inlined_call_operand.vmem [shape: f32[1,32,140], index: 0, kind: input, shape index: {}]
  %s1 = inlined_call_operand.vmem [shape: f32[1,32,140], index: 1, kind: input, shape index: {}]
  %s2 = inlined_call_operand.vmem [shape: f32[1,128], index: 2, kind: output, shape index: {}]
  %s3 = sld [smem:[#allocation0]]
  $region125: #{ce_l2_loss_forward.3} parent=0
    _
  %s5 = ssub.s32 1, %s3
  %s6 = scalar_select 0, %s5, %s3
  $region1: #{ce_l2_loss_forward.3} parent=0
    #allocation3 [shape = 'u8[32768]{0}', space=vmem, size = 0x8000, scoped, tag = 'input window, operand 0']
    #allocation4 [shape = 'u8[32768]{0}', space=vmem, size = 0x8000, scoped, tag = 'input window, operand 1']
    loop: start=0, step=1, limit=4
    $region2: #{ce_l2_loss_forward.3} parent=1 // loop_pre_header
      _
    $region3: #{ce_l2_loss_forward.3} parent=1 // loop_header
      %s8 = sphi 0, %s12
      %p9 = scmp.ge.s32.totalorder %s8, 4
      %s18 = sphi 0, %s20
      %s21 = sphi 0, %s18
      %s22 = sphi 0, %s21
      %s38 = sphi 0, %s22
      %s44 = sphi 0, %s46
      %s47 = sphi 0, %s44
      %s48 = sphi 0, %s47
      %s64 = sphi 0, %s48
      %s68 = sphi 0, %s68
      %s70 = sphi 0, %s68
      %s71 = sphi 0, %s70
      %s85 = sphi 0, %s71
    $region4: #{ce_l2_loss_forward.3} parent=1 // loop_header_branch
      %11 = sbr.rel (%p9) target = $region8
    $region5: #{ce_l2_loss_forward.3} parent=1 // loop_body
      %s13 = ssub.s32 %s8, 1
      %s14 = ssub.s32 %s8, 2
      %s15 = sadd.s32 %s8, 1
      %s16 = ssub.s32 %s8, %s15
      %p17 = scmp.eq.s32.totalorder %s16, 0
      %s19 = sadd.s32 %s18, 1
      %s20 = scalar_select %p17, %s18, %s19
      %p23 = pneg %p17
      %p24 = scmp.eq.s32.totalorder %s8, 1
      %p25 = por %p23, %p24
      %p26 = scmp.ne.s32.totalorder %s18, %s21
      %p27 = scmp.eq.s32.totalorder %s8, 0
      %p28 = por %p26, %p27
      %p29 = scmp.ne.s32.totalorder %s18, %s21
      %p30 = scmp.eq.s32.totalorder %s13, 1
      %p31 = por %p29, %p30
      %p32 = scmp.ne.s32.totalorder %s21, %s22
      %p33 = scmp.eq.s32.totalorder %s13, 0
      %p34 = por %p32, %p33
      %p35 = scmp.ne.s32.totalorder %s21, %s22
      %p36 = scmp.eq.s32.totalorder %s14, 1
      %p37 = por %p35, %p36
      %p39 = scmp.ne.s32.totalorder %s22, %s38
      %p40 = scmp.eq.s32.totalorder %s14, 0
      %p41 = por %p39, %p40
      %s42 = ssub.s32 %s8, %s15
      %p43 = scmp.eq.s32.totalorder %s42, 0
      %s45 = sadd.s32 %s44, 1
      %s46 = scalar_select %p43, %s44, %s45
      %p49 = pneg %p43
      %p50 = scmp.eq.s32.totalorder %s8, 1
      %p51 = por %p49, %p50
      %p52 = scmp.ne.s32.totalorder %s44, %s47
      %p53 = scmp.eq.s32.totalorder %s8, 0
      %p54 = por %p52, %p53
      %p55 = scmp.ne.s32.totalorder %s44, %s47
      %p56 = scmp.eq.s32.totalorder %s13, 1
      %p57 = por %p55, %p56
      %p58 = scmp.ne.s32.totalorder %s47, %s48
      %p59 = scmp.eq.s32.totalorder %s13, 0
      %p60 = por %p58, %p59
      %p61 = scmp.ne.s32.totalorder %s47, %s48
      %p62 = scmp.eq.s32.totalorder %s14, 1
      %p63 = por %p61, %p62
      %p65 = scmp.ne.s32.totalorder %s48, %s64
      %p66 = scmp.eq.s32.totalorder %s14, 0
      %p67 = por %p65, %p66
      %s69 = sadd.s32 %s68, 1
      %p72 = scmp.eq.s32.totalorder %s8, 1
      %p73 = scmp.ne.s32.totalorder %s68, %s70
      %p74 = scmp.eq.s32.totalorder %s8, 0
      %p75 = por %p73, %p74
      %p76 = scmp.ne.s32.totalorder %s68, %s70
      %p77 = scmp.eq.s32.totalorder %s13, 1
      %p78 = por %p76, %p77
      %p79 = scmp.ne.s32.totalorder %s70, %s71
      %p80 = scmp.eq.s32.totalorder %s13, 0
      %p81 = por %p79, %p80
      %p82 = scmp.ne.s32.totalorder %s70, %s71
      %p83 = scmp.eq.s32.totalorder %s14, 1
      %p84 = por %p82, %p83
      %p86 = scmp.ne.s32.totalorder %s71, %s85
      %p87 = scmp.eq.s32.totalorder %s14, 0
      %p88 = por %p86, %p87
      %p89 = scmp.le.s32.totalorder 1, %s8
      %p90 = scmp.lt.s32.totalorder %s8, 3
      %p91 = pnand %p89, %p90
      %p92 = pneg %p91
      // Predicated region
      $region9: #{ce_l2_loss_forward.3} parent=5 // pred_check
        _
      $region10: #{ce_l2_loss_forward.3} parent=5 // pred_check_branch
        %94 = sbr.rel (%p91) target = $region12
      $region11: #{ce_l2_loss_forward.3} parent=5 // pred_region
        %s95 = ssub.s32 %s8, 1
      $region12: #{ce_l2_loss_forward.3} parent=5 // pred_fallthru
        _
      %p96 = scmp.lt.s32.totalorder %s8, 2
      // Predicated region
      $region13: #{ce_l2_loss_forward.3} parent=5 // pred_check
        %p97 = pneg %p96
      $region14: #{ce_l2_loss_forward.3} parent=5 // pred_check_branch
        %99 = sbr.rel (%p97) target = $region16
      $region15: #{ce_l2_loss_forward.3} parent=5 // pred_region
        // Predicated region
        $region17: #{ce_l2_loss_forward.3} parent=15 // pred_check
          %p100 = pneg %p28
        $region18: #{ce_l2_loss_forward.3} parent=15 // pred_check_branch
          %102 = sbr.rel (%p100) target = $region20
        $region19: #{ce_l2_loss_forward.3} parent=15 // pred_region
          %s103 = sand.u32 %s18, 1
          %s104 = sand.u32 %s18, 1
          %s105 = smul.addr %s104, 32
          %s106 = scalar_lea.vmem [#allocation3], %s105
          %s107 = smul.addr %s8, 8
          %s108 = scalar_lea.vmem %s0, %s107
          // Predicated region
          $region21: #{ce_l2_loss_forward.3} parent=19 // pred_check
            _
          $region22: #{ce_l2_loss_forward.3} parent=19 // pred_check_branch
            %110 = sbr.rel (0) target = $region24
          $region23: #{ce_l2_loss_forward.3} parent=19 // pred_region
            // Predicated region
            $region25: #{ce_l2_loss_forward.3} parent=23 // pred_check
              _
            $region26: #{ce_l2_loss_forward.3} parent=23 // pred_check_branch
              %112 = sbr.rel (0) target = $region28
            $region27: #{ce_l2_loss_forward.3} parent=23 // pred_region
              // Predicated region
              $region40: #{ce_l2_loss_forward.3} parent=27 // pred_check
                _
              $region41: #{ce_l2_loss_forward.3} parent=27 // pred_check_branch
                %134 = sbr.rel (0) target = $region43
              $region42: #{ce_l2_loss_forward.3} parent=27 // pred_region
                loop: start=0, step=1, limit=1
                $region44: #{ce_l2_loss_forward.3} parent=42 // loop_pre_header
                  _
                $region45: #{ce_l2_loss_forward.3} parent=42 // loop_header
                  %s136 = sphi 0, %s140
                  %p137 = scmp.ge.s32.totalorder %s136, 1
                  %s141 = sphi %s108, %s108
                  %s142 = sphi %s106, %s106
                $region46: #{ce_l2_loss_forward.3} parent=42 // loop_header_branch
                  %139 = sbr.rel (%p137) target = $region50
                $region47: #{ce_l2_loss_forward.3} parent=42 // loop_body
                  %v143 = vld [vmem:[%s141] sm:$0xff]
                  %144 = vst [vmem:[%s142] sm:$0xff] %v143
                  %v145 = vld [vmem:[%s141 + $0x10] sm:$0xff]
                  %146 = vst [vmem:[%s142 + $0x8] sm:$0xff] %v145
                  %v147 = vld [vmem:[%s141 + $0x20] sm:$0xff]
                  %148 = vst [vmem:[%s142 + $0x10] sm:$0xff] %v147
                  %v149 = vld [vmem:[%s141 + $0x30] sm:$0xff]
                  %150 = vst [vmem:[%s142 + $0x18] sm:$0xff] %v149
                $region48: #{ce_l2_loss_forward.3} parent=42 // loop_footer
                  %s140 = sadd.s32 1, %s136
                $region49: #{ce_l2_loss_forward.3} parent=42 // loop_footer_branch
                  %135 = sbr.rel target = $region45
                $region50: #{ce_l2_loss_forward.3} parent=42 // loop_exit
                  _
              $region43: #{ce_l2_loss_forward.3} parent=27 // pred_fallthru
                _
              // Predicated region
              $region51: #{ce_l2_loss_forward.3} parent=27 // pred_check
                _
              $region52: #{ce_l2_loss_forward.3} parent=27 // pred_check_branch
                %152 = sbr.rel target = $region54
              $region53: #{ce_l2_loss_forward.3} parent=27 // pred_region
                _
              $region54: #{ce_l2_loss_forward.3} parent=27 // pred_fallthru
                _
            $region28: #{ce_l2_loss_forward.3} parent=23 // pred_fallthru
              _
            // Predicated region
            $region29: #{ce_l2_loss_forward.3} parent=23 // pred_check
              _
            $region30: #{ce_l2_loss_forward.3} parent=23 // pred_check_branch
              %114 = sbr.rel target = $region32
            $region31: #{ce_l2_loss_forward.3} parent=23 // pred_region
              %s116 = ssub.s32 256, 1
              loop: start=0, step=1, limit=1
              $region33: #{ce_l2_loss_forward.3} parent=31 // loop_pre_header
                _
              $region34: #{ce_l2_loss_forward.3} parent=31 // loop_header
                %s118 = sphi 0, %s122
                %p119 = scmp.ge.s32.totalorder %s118, 1
                %s123 = sphi %s108, %s108
                %s124 = sphi %s106, %s106
              $region35: #{ce_l2_loss_forward.3} parent=31 // loop_header_branch
                %121 = sbr.rel (%p119) target = $region39
              $region36: #{ce_l2_loss_forward.3} parent=31 // loop_body
                %v125 = vld [vmem:[%s123] sm:%s116]
                %126 = vst [vmem:[%s124] sm:%s116] %v125
                %v127 = vld [vmem:[%s123 + $0x10] sm:%s116]
                %128 = vst [vmem:[%s124 + $0x8] sm:%s116] %v127
                %v129 = vld [vmem:[%s123 + $0x20] sm:%s116]
                %130 = vst [vmem:[%s124 + $0x10] sm:%s116] %v129
                %v131 = vld [vmem:[%s123 + $0x30] sm:%s116]
                %132 = vst [vmem:[%s124 + $0x18] sm:%s116] %v131
              $region37: #{ce_l2_loss_forward.3} parent=31 // loop_footer
                %s122 = sadd.s32 1, %s118
              $region38: #{ce_l2_loss_forward.3} parent=31 // loop_footer_branch
                %117 = sbr.rel target = $region34
              $region39: #{ce_l2_loss_forward.3} parent=31 // loop_exit
                _
            $region32: #{ce_l2_loss_forward.3} parent=23 // pred_fallthru
              _
          $region24: #{ce_l2_loss_forward.3} parent=19 // pred_fallthru
            _
          %153 = vnop
        $region20: #{ce_l2_loss_forward.3} parent=15 // pred_fallthru
          _
        // Predicated region
        $region55: #{ce_l2_loss_forward.3} parent=15 // pred_check
          %p154 = pneg %p54
        $region56: #{ce_l2_loss_forward.3} parent=15 // pred_check_branch
          %156 = sbr.rel (%p154) target = $region58
        $region57: #{ce_l2_loss_forward.3} parent=15 // pred_region
          %s157 = sand.u32 %s44, 1
          %s158 = sand.u32 %s44, 1
          %s159 = smul.addr %s158, 32
          %s160 = scalar_lea.vmem [#allocation4], %s159
          %s161 = smul.addr %s8, 8
          %s162 = scalar_lea.vmem %s1, %s161
          // Predicated region
          $region59: #{ce_l2_loss_forward.3} parent=57 // pred_check
            _
          $region60: #{ce_l2_loss_forward.3} parent=57 // pred_check_branch
            %164 = sbr.rel (0) target = $region62
          $region61: #{ce_l2_loss_forward.3} parent=57 // pred_region
            // Predicated region
            $region63: #{ce_l2_loss_forward.3} parent=61 // pred_check
              _
            $region64: #{ce_l2_loss_forward.3} parent=61 // pred_check_branch
              %166 = sbr.rel (0) target = $region66
            $region65: #{ce_l2_loss_forward.3} parent=61 // pred_region
              // Predicated region
              $region78: #{ce_l2_loss_forward.3} parent=65 // pred_check
                _
              $region79: #{ce_l2_loss_forward.3} parent=65 // pred_check_branch
                %188 = sbr.rel (0) target = $region81
              $region80: #{ce_l2_loss_forward.3} parent=65 // pred_region
                loop: start=0, step=1, limit=1
                $region82: #{ce_l2_loss_forward.3} parent=80 // loop_pre_header
                  _
                $region83: #{ce_l2_loss_forward.3} parent=80 // loop_header
                  %s190 = sphi 0, %s194
                  %p191 = scmp.ge.s32.totalorder %s190, 1
                  %s195 = sphi %s162, %s162
                  %s196 = sphi %s160, %s160
                $region84: #{ce_l2_loss_forward.3} parent=80 // loop_header_branch
                  %193 = sbr.rel (%p191) target = $region88
                $region85: #{ce_l2_loss_forward.3} parent=80 // loop_body
                  %v197 = vld [vmem:[%s195] sm:$0xff]
                  %198 = vst [vmem:[%s196] sm:$0xff] %v197
                  %v199 = vld [vmem:[%s195 + $0x10] sm:$0xff]
                  %200 = vst [vmem:[%s196 + $0x8] sm:$0xff] %v199
                  %v201 = vld [vmem:[%s195 + $0x20] sm:$0xff]
                  %202 = vst [vmem:[%s196 + $0x10] sm:$0xff] %v201
                  %v203 = vld [vmem:[%s195 + $0x30] sm:$0xff]
                  %204 = vst [vmem:[%s196 + $0x18] sm:$0xff] %v203
                $region86: #{ce_l2_loss_forward.3} parent=80 // loop_footer
                  %s194 = sadd.s32 1, %s190
                $region87: #{ce_l2_loss_forward.3} parent=80 // loop_footer_branch
                  %189 = sbr.rel target = $region83
                $region88: #{ce_l2_loss_forward.3} parent=80 // loop_exit
                  _
              $region81: #{ce_l2_loss_forward.3} parent=65 // pred_fallthru
                _
              // Predicated region
              $region89: #{ce_l2_loss_forward.3} parent=65 // pred_check
                _
              $region90: #{ce_l2_loss_forward.3} parent=65 // pred_check_branch
                %206 = sbr.rel target = $region92
              $region91: #{ce_l2_loss_forward.3} parent=65 // pred_region
                _
              $region92: #{ce_l2_loss_forward.3} parent=65 // pred_fallthru
                _
            $region66: #{ce_l2_loss_forward.3} parent=61 // pred_fallthru
              _
            // Predicated region
            $region67: #{ce_l2_loss_forward.3} parent=61 // pred_check
              _
            $region68: #{ce_l2_loss_forward.3} parent=61 // pred_check_branch
              %168 = sbr.rel target = $region70
            $region69: #{ce_l2_loss_forward.3} parent=61 // pred_region
              %s170 = ssub.s32 256, 1
              loop: start=0, step=1, limit=1
              $region71: #{ce_l2_loss_forward.3} parent=69 // loop_pre_header
                _
              $region72: #{ce_l2_loss_forward.3} parent=69 // loop_header
                %s172 = sphi 0, %s176
                %p173 = scmp.ge.s32.totalorder %s172, 1
                %s177 = sphi %s162, %s162
                %s178 = sphi %s160, %s160
              $region73: #{ce_l2_loss_forward.3} parent=69 // loop_header_branch
                %175 = sbr.rel (%p173) target = $region77
              $region74: #{ce_l2_loss_forward.3} parent=69 // loop_body
                %v179 = vld [vmem:[%s177] sm:%s170]
                %180 = vst [vmem:[%s178] sm:%s170] %v179
                %v181 = vld [vmem:[%s177 + $0x10] sm:%s170]
                %182 = vst [vmem:[%s178 + $0x8] sm:%s170] %v181
                %v183 = vld [vmem:[%s177 + $0x20] sm:%s170]
                %184 = vst [vmem:[%s178 + $0x10] sm:%s170] %v183
                %v185 = vld [vmem:[%s177 + $0x30] sm:%s170]
                %186 = vst [vmem:[%s178 + $0x18] sm:%s170] %v185
              $region75: #{ce_l2_loss_forward.3} parent=69 // loop_footer
                %s176 = sadd.s32 1, %s172
              $region76: #{ce_l2_loss_forward.3} parent=69 // loop_footer_branch
                %171 = sbr.rel target = $region72
              $region77: #{ce_l2_loss_forward.3} parent=69 // loop_exit
                _
            $region70: #{ce_l2_loss_forward.3} parent=61 // pred_fallthru
              _
          $region62: #{ce_l2_loss_forward.3} parent=57 // pred_fallthru
            _
          %207 = vnop
        $region58: #{ce_l2_loss_forward.3} parent=15 // pred_fallthru
          _
      $region16: #{ce_l2_loss_forward.3} parent=5 // pred_fallthru
        _
      %p208 = scmp.le.s32.totalorder 1, %s8
      %p209 = scmp.lt.s32.totalorder %s8, 3
      %p210 = pnand %p208, %p209
      %p211 = pneg %p210
      // Predicated region
      $region93: #{ce_l2_loss_forward.3} parent=5 // pred_check
        _
      $region94: #{ce_l2_loss_forward.3} parent=5 // pred_check_branch
        %213 = sbr.rel (%p210) target = $region96
      $region95: #{ce_l2_loss_forward.3} parent=5 // pred_region
        %s214 = ssub.s32 %s8, 1
        %s215 = sand.u32 %s21, 1
        %s216 = sand.u32 %s21, 1
        %s217 = smul.addr %s216, 32
        %s218 = scalar_lea.vmem [#allocation3], %s217
        // Predicated region
        $region97: #{ce_l2_loss_forward.3} parent=95 // pred_check
          %p219 = pneg %p34
        $region98: #{ce_l2_loss_forward.3} parent=95 // pred_check_branch
          %221 = sbr.rel (%p219) target = $region100
        $region99: #{ce_l2_loss_forward.3} parent=95 // pred_region
          _
        $region100: #{ce_l2_loss_forward.3} parent=95 // pred_fallthru
          _
        %s222 = sand.u32 %s47, 1
        %s223 = sand.u32 %s47, 1
        %s224 = smul.addr %s223, 32
        %s225 = scalar_lea.vmem [#allocation4], %s224
        // Predicated region
        $region101: #{ce_l2_loss_forward.3} parent=95 // pred_check
          %p226 = pneg %p60
        $region102: #{ce_l2_loss_forward.3} parent=95 // pred_check_branch
          %228 = sbr.rel (%p226) target = $region104
        $region103: #{ce_l2_loss_forward.3} parent=95 // pred_region
          _
        $region104: #{ce_l2_loss_forward.3} parent=95 // pred_fallthru
          _
        %s229 = sand.u32 %s21, 1
        %s230 = sand.u32 %s21, 1
        %s231 = smul.addr %s230, 32
        %s232 = scalar_lea.vmem [#allocation3], %s231
        %p233 = pneg %p34
        %p234 = pneg %p31
        %s235 = sand.u32 %s47, 1
        %s236 = sand.u32 %s47, 1
        %s237 = smul.addr %s236, 32
        %s238 = scalar_lea.vmem [#allocation4], %s237
        %p239 = pneg %p60
        %p240 = pneg %p57
        %p241 = pneg %p81
        %p242 = pneg %p78
        %p243 = scmp.eq.s32.totalorder %s13, 0
        // Predicated region
        $region105: #{ce_l2_loss_forward.3} parent=95 // pred_check
          %p244 = pneg %p243
        $region106: #{ce_l2_loss_forward.3} parent=95 // pred_check_branch
          %246 = sbr.rel (%p244) target = $region108
        $region107: #{ce_l2_loss_forward.3} parent=95 // pred_region
          %247 = vst [vmem:[#allocation2] sm:$0x1] 0.0
        $region108: #{ce_l2_loss_forward.3} parent=95 // pred_fallthru
          _
        %v248 = vld [vmem:[%s218] sm:$0xff]
        %v249 = vld [vmem:[%s218 + $0x8] sm:$0xff]
        %v250 = vld [vmem:[%s218 + $0x10] sm:$0xff]
        %v251 = vld [vmem:[%s218 + $0x18] sm:$0xff]
        %v252 = vld [vmem:[%s225] sm:$0xff]
        %v253 = vld [vmem:[%s225 + $0x8] sm:$0xff]
        %v254 = vld [vmem:[%s225 + $0x10] sm:$0xff]
        %v255 = vld [vmem:[%s225 + $0x18] sm:$0xff]
        %v256 = vmax.f32 %v248, %v249
        %v257 = vmax.f32 %v250, %v251
        %v258 = vmax.f32 %v256, %v257
        %v259 = vrot.slane %v258, 4
        %v260 = vmax.f32 %v258, %v259
        %v261 = vrot.slane %v260, 2
        %v262 = vmax.f32 %v260, %v261
        %v263 = vrot.slane %v262, 1
        %v264 = vmax.f32 %v262, %v263
        %v265 = vsub.f32 %v248, %v264
        %v266 = vsub.f32 %v249, %v264
        %v267 = vsub.f32 %v250, %v264
        %v268 = vsub.f32 %v251, %v264
        %v269 = vmul.f32 %v265, 1.442695
        %v270 = vpow.pop %v269
        %v271 = vmul.f32 %v266, 1.442695
        %v272 = vpow.pop %v271
        %v273 = vmul.f32 %v267, 1.442695
        %v274 = vpow.pop %v273
        %v275 = vmul.f32 %v268, 1.442695
        %v276 = vpow.pop %v275
        %v277 = vadd.f32 %v270, %v272
        %v278 = vadd.f32 %v277, %v274
        %v279 = vadd.f32 %v278, %v276
        %v280 = vrot.slane %v279, 4
        %v281 = vadd.f32 %v279, %v280
        %v282 = vrot.slane %v281, 2
        %v283 = vadd.f32 %v281, %v282
        %v284 = vrot.slane %v283, 1
        %v285 = vadd.f32 %v283, %v284
        %v286 = vrcp.pop %v285
        %v287 = vmul.f32 %v270, %v286
        %v288 = vmul.f32 %v272, %v286
        %v289 = vmul.f32 %v274, %v286
        %v290 = vmul.f32 %v276, %v286
        %v291 = vsub.f32 %v287, %v252
        %v292 = vsub.f32 %v288, %v253
        %v293 = vsub.f32 %v289, %v254
        %v294 = vsub.f32 %v290, %v255
        %v295 = vmul.f32 %v291, %v291
        %v296 = vmul.f32 %v292, %v292
        %v297 = vmul.f32 %v293, %v293
        %v298 = vmul.f32 %v294, %v294
        %v299 = vadd.f32 %v295, %v296
        %v300 = vadd.f32 %v299, %v297
        %v301 = vadd.f32 %v300, %v298
        %v302 = vrot.slane %v301, 4
        %v303 = vadd.f32 %v301, %v302
        %v304 = vrot.slane %v303, 2
        %v305 = vadd.f32 %v303, %v304
        %v306 = vrot.slane %v305, 1
        %v307 = vadd.f32 %v305, %v306
        %v308 = vlaneseq
        %v309 = vand.u32 %v308, 127
        %s310 = smul.u32 %s13, 128
        %v311 = vstv %s310
        %v312 = vadd.s32 %v309, %v311
        %v313 = vld [vmem:[#allocation2] sm:$0x1]
        %vm314 = vcmp.lt.s32.totalorder %v312, 140
        %v315 = vsel %vm314, %v307, 0.0
        %v316 = vadd.f32 %v313, %v315
        %317 = vst [vmem:[#allocation2] sm:$0x1] %v316
        %p318 = scmp.eq.s32.totalorder %s13, 1
        // Predicated region
        $region109: #{ce_l2_loss_forward.3} parent=95 // pred_check
          %p319 = pneg %p318
        $region110: #{ce_l2_loss_forward.3} parent=95 // pred_check_branch
          %321 = sbr.rel (%p319) target = $region112
        $region111: #{ce_l2_loss_forward.3} parent=95 // pred_region
          %vm322 = vcmp.eq.s32.totalorder %v309, 0
          %v323 = vld [vmem:[#allocation2] sm:$0x1]
          %vm324 = vcmask 1040384
          %v325 = vsel %vm324, %v323, 0.0
          %326 = vadd.xlane.f32.xlu0 %v325
          %v327 = vpop.xlane.xlu0 %326
          %v328 = vrot.slane %v327, 4
          %v329 = vadd.f32 %v327, %v328
          %v330 = vrot.slane %v329, 2
          %v331 = vadd.f32 %v329, %v330
          %v332 = vrot.slane %v331, 1
          %v333 = vadd.f32 %v331, %v332
          %s334 = vtos %v333
          %v335 = vstv %s334
          %v336 = vsel %vm322, %v335, 0.0
          %337 = vst [vmem:[%s2] sm:$0x1] %v336
        $region112: #{ce_l2_loss_forward.3} parent=95 // pred_fallthru
          _
        // Predicated region
        $region113: #{ce_l2_loss_forward.3} parent=95 // pred_check
          %p338 = pneg %p78
        $region114: #{ce_l2_loss_forward.3} parent=95 // pred_check_branch
          %340 = sbr.rel (%p338) target = $region116
        $region115: #{ce_l2_loss_forward.3} parent=95 // pred_region
          _
        $region116: #{ce_l2_loss_forward.3} parent=95 // pred_fallthru
          _
        // Predicated region
        $region117: #{ce_l2_loss_forward.3} parent=95 // pred_check
          %p341 = pneg %p78
        $region118: #{ce_l2_loss_forward.3} parent=95 // pred_check_branch
          %343 = sbr.rel (%p341) target = $region120
        $region119: #{ce_l2_loss_forward.3} parent=95 // pred_region
          _
        $region120: #{ce_l2_loss_forward.3} parent=95 // pred_fallthru
          _
      $region96: #{ce_l2_loss_forward.3} parent=5 // pred_fallthru
        _
      %p344 = scmp.le.s32.totalorder 2, %s8
      // Predicated region
      $region121: #{ce_l2_loss_forward.3} parent=5 // pred_check
        %p345 = pneg %p344
      $region122: #{ce_l2_loss_forward.3} parent=5 // pred_check_branch
        %347 = sbr.rel (%p345) target = $region124
      $region123: #{ce_l2_loss_forward.3} parent=5 // pred_region
        %s348 = ssub.s32 %s8, 2
      $region124: #{ce_l2_loss_forward.3} parent=5 // pred_fallthru
        _
    $region6: #{ce_l2_loss_forward.3} parent=1 // loop_footer
      %s12 = sadd.s32 1, %s8
    $region7: #{ce_l2_loss_forward.3} parent=1 // loop_footer_branch
      %7 = sbr.rel target = $region3
    $region8: #{ce_l2_loss_forward.3} parent=1 // loop_exit
      _

</llo_original>
